<compile_context>
chip_gen: v7x
topology: tpu7x:2x2x1
jax: 0.10.0
libtpu: 0.0.40
codegen_flags: <defaults>
</compile_context>

<pallas_src>
import jax
import jax.numpy as jnp
from jax.experimental import pallas as pl
from jax.experimental.pallas import tpu as pltpu


# ---------------------------------------------------------------------------
# Kernel
# ---------------------------------------------------------------------------
def make_residual_block_call(NG, H, L):
    """Builds the pallas_call for NG image-groups of shape (H, L) each.

    L = G * W * C is the fused (image, width, channel) lane width of one row.
    """

    def kernel(x_ref, w1_ref, b1_ref, w2_ref, b2_ref, o_ref):
        # x_ref:  (H, L)        one image group, rows = H, lanes = (g, w, c)
        # w*_ref: (3*L, L)      banded block-diagonal conv weight, rows grouped by ky
        # b*_ref: (1, L)        f32 bias tiled across (g, w)
        # o_ref:  (H, L)        f32 output block
        x32 = x_ref[...].astype(jnp.float32)          # residual path kept in f32
        zrow = jnp.zeros((1, L), jnp.float32)

        def conv3x3(v, w_ref, b_ref):
            # v: (H, L) f32.  3x3 'same' conv in the lane-fused layout:
            #   * vertical taps  -> sublane shift with a zero halo row (in vregs),
            #   * horizontal taps + W / image-boundary zeros -> folded into the
            #     banded weight, so no lane-misaligned slices are ever needed.
            up = jnp.concatenate([zrow, v[:H - 1, :]], axis=0)   # v[h-1], 0 at h=0
            dn = jnp.concatenate([v[1:, :], zrow], axis=0)       # v[h+1], 0 at h=H-1
            dt = w_ref.dtype                                     # f32 or bf16 MXU feed
            acc = jnp.dot(up.astype(dt), w_ref[0:L, :],
                          preferred_element_type=jnp.float32)
            acc = acc + jnp.dot(v.astype(dt), w_ref[L:2 * L, :],
                                preferred_element_type=jnp.float32)
            acc = acc + jnp.dot(dn.astype(dt), w_ref[2 * L:3 * L, :],
                                preferred_element_type=jnp.float32)
            return acc + b_ref[...]

        h1 = jnp.maximum(conv3x3(x32, w1_ref, b1_ref), 0.0)      # conv1 + ReLU (f32)
        h2 = conv3x3(h1, w2_ref, b2_ref)                         # conv2        (f32)
        o_ref[...] = (x32 + h2).astype(o_ref.dtype)              # residual, dense store

    x_spec = pl.BlockSpec((H, L), lambda n: (n, 0))
    w_spec = pl.BlockSpec((3 * L, L), lambda n: (0, 0))   # grid-invariant -> resident
    b_spec = pl.BlockSpec((1, L), lambda n: (0, 0))
    out_spec = pl.BlockSpec((H, L), lambda n: (n, 0))

    return pl.pallas_call(
        kernel,
        out_shape=jax.ShapeDtypeStruct((NG * H, L), jnp.float32),
        grid_spec=pltpu.PrefetchScalarGridSpec(
            num_scalar_prefetch=0,
            grid=(NG,),
            in_specs=[x_spec, w_spec, b_spec, w_spec, b_spec],
            out_specs=out_spec,
        ),
        compiler_params=pltpu.CompilerParams(
            dimension_semantics=("parallel",)),
    )


# ---------------------------------------------------------------------------
# Wrapper helpers
# ---------------------------------------------------------------------------
def _tensorcores_per_chip():
    """2 on v7x (megacore-style dual TC), else 1. Best-effort detection."""
    try:
        kind = jax.devices()[0].device_kind.lower()
    except Exception:
        return 1
    return 2 if "v7" in kind else 1


def _pick_group(N, WC, num_tc):
    """Images fused into the lane axis per grid step.

    Grow the group until the output block is >= 128 lanes wide, but keep at
    least `num_tc` grid steps so every TensorCore gets a parallel step.
    """
    g = 1
    for cand in range(1, N + 1):
        if N % cand:
            continue
        if N // cand < max(num_tc, 1):
            break
        g = cand
        if cand * WC >= 128:
            break
    return g


def _banded_conv_weight(w, W, G, dtype):
    """(Cout, Cin, 3, 3) torch-layout weight -> (3*G*W*Cin, G*W*Cout) matrix.

    Row index = ky*(G*W*Cin) + g*(W*Cin) + w_in*Cin + cin
    Col index =                g*(W*Cout) + w_out*Cout + cout
    Non-zero iff same image g and kx = w_in - w_out + 1 in [0, 3); rows for
    out-of-range w_in simply never match, which realises the zero padding
    along W (and across fused images) with no in-kernel work.
    """
    Cout, Cin, KH, KW = w.shape
    wt = jnp.transpose(w, (2, 3, 1, 0))                                  # (KH,KW,Cin,Cout)
    kx = jnp.arange(W)[:, None] - jnp.arange(W)[None, :] + (KW // 2)     # (W_in, W_out)
    valid = (kx >= 0) & (kx < KW)
    band = jnp.where(valid[None, :, :, None, None],
                     wt[:, jnp.clip(kx, 0, KW - 1)],                     # (KH,Wi,Wo,Ci,Co)
                     0.0)
    band = jnp.transpose(band, (0, 1, 3, 2, 4))                          # (KH,Wi,Ci,Wo,Co)
    band = band.reshape(KH, W * Cin, W * Cout)
    big = jnp.einsum('gh,kio->kgiho', jnp.eye(G, dtype=band.dtype), band)
    return big.reshape(KH * G * W * Cin, G * W * Cout).astype(dtype)


def residual_block(x_nchw, w1, b1, w2, b2, *, compute_dtype=jnp.float32):
    """x_nchw: (N, C, H, W); w: (Cout, Cin, 3, 3) like PyTorch; b: (C,).

    compute_dtype=jnp.bfloat16 halves activation/weight HBM+VMEM traffic and
    runs the MXU in bf16 (f32 accumulate); residual/ReLU stay in f32.
    """
    N, C, H, W = x_nchw.shape
    assert H % 8 == 0, "H must be a multiple of 8 (sublane tile) for this kernel"
    WC = W * C
    G = _pick_group(N, WC, _tensorcores_per_chip())
    NG = N // G
    L = G * WC

    # NCHW -> lane-fused (NG*H, G*W*C).
    # TODO(synk): in a multi-block network keep activations in this lane-fused
    # layout end-to-end (these transposes are a full HBM pass each and cost
    # more than the kernel at these sizes); kept here only to match the NCHW
    # module interface of a standalone block.
    x2d = (jnp.transpose(x_nchw, (0, 2, 3, 1))        # (N, H, W, C)
             .reshape(NG, G, H, W, C)
             .transpose(0, 2, 1, 3, 4)                # (NG, H, G, W, C)
             .reshape(NG * H, L)
             .astype(compute_dtype))

    # TODO(synk): for large W*C, tile the banded weight along W instead of
    # materialising the full (3*L, L) block (v7x VMEM = 64 MiB physical).
    w1big = _banded_conv_weight(w1, W, G, compute_dtype)
    w2big = _banded_conv_weight(w2, W, G, compute_dtype)
    b1big = jnp.tile(b1, G * W).reshape(1, L).astype(jnp.float32)
    b2big = jnp.tile(b2, G * W).reshape(1, L).astype(jnp.float32)

    call = make_residual_block_call(NG, H, L)
    out2d = call(x2d, w1big, b1big, w2big, b2big)     # (NG*H, L) f32

    out = (out2d.reshape(NG, H, G, W, C)
                 .transpose(0, 2, 1, 3, 4)
                 .reshape(N, H, W, C))
    return jnp.transpose(out, (0, 3, 1, 2))           # back to NCHW


def reference_forward(x, w1, b1, w2, b2):
    """Pure-JAX reference matching nn.Conv2d(..., padding=1) semantics."""
    def conv(inp, w, b):
        y = jax.lax.conv_general_dilated(
            inp, w, window_strides=(1, 1), padding="SAME",
            dimension_numbers=("NCHW", "OIHW", "NCHW"))
        return y + b[None, :, None, None]
    h = jax.nn.relu(conv(x, w1, b1))
    return x + conv(h, w2, b2)


if __name__ == "__main__":
    N, C, H, W = 2, 4, 16, 16

    key = jax.random.PRNGKey(0)
    kx, kw1, kb1, kw2, kb2 = jax.random.split(key, 5)
    x = jax.random.normal(kx, (N, C, H, W), dtype=jnp.float32)
    w1 = 0.1 * jax.random.normal(kw1, (C, C, 3, 3), dtype=jnp.float32)
    b1 = 0.1 * jax.random.normal(kb1, (C,), dtype=jnp.float32)
    w2 = 0.1 * jax.random.normal(kw2, (C, C, 3, 3), dtype=jnp.float32)
    b2 = 0.1 * jax.random.normal(kb2, (C,), dtype=jnp.float32)

    ref = jax.block_until_ready(reference_forward(x, w1, b1, w2, b2))

    # f32 path: exact parity with the PyTorch reference.
    out = jax.block_until_ready(residual_block(x, w1, b1, w2, b2))
    err = float(jnp.max(jnp.abs(out - ref)))
    assert out.shape == (N, C, H, W) and out.dtype == jnp.float32
    assert err < 1e-3, f"f32 mismatch vs reference: {err}"

    # bf16 path (per perf review): bf16 quantization of activations + weights
    # bounds the error to a few e-2 at these magnitudes, hence the loose check.
    out_bf16 = jax.block_until_ready(
        residual_block(x, w1, b1, w2, b2, compute_dtype=jnp.bfloat16))
    err_bf16 = float(jnp.max(jnp.abs(out_bf16 - ref)))
    assert out_bf16.shape == (N, C, H, W) and out_bf16.dtype == jnp.float32
    assert err_bf16 < 5e-2, f"bf16 mismatch vs reference: {err_bf16}"

    print("KERNEL_OK")
</pallas_src>

<mosaic_0001>
module attributes {stable_mosaic.version = 11 : i64} {
  func.func @kernel(%arg0: i32, %arg1: memref<16x128xf32, #tpu.memory_space<vmem>>, %arg2: memref<384x128xf32, #tpu.memory_space<vmem>>, %arg3: memref<1x128xf32, #tpu.memory_space<vmem>>, %arg4: memref<384x128xf32, #tpu.memory_space<vmem>>, %arg5: memref<1x128xf32, #tpu.memory_space<vmem>>, %arg6: memref<16x128xf32, #tpu.memory_space<vmem>>) attributes {dimension_semantics = [#tpu.dimension_semantics<parallel>], iteration_bounds = array<i64: 1>, scalar_prefetch = 0 : i64, scratch_operands = 0 : i64, tpu.core_type = #tpu.core_type<tc>, window_params = [{transform_indices = @transform_0, window_bounds = array<i64: 16, 128>}, {pipeline_mode = #tpu.pipeline_mode<synchronous>, transform_indices = @transform_1, window_bounds = array<i64: 384, 128>}, {pipeline_mode = #tpu.pipeline_mode<synchronous>, transform_indices = @transform_2, window_bounds = array<i64: 1, 128>}, {pipeline_mode = #tpu.pipeline_mode<synchronous>, transform_indices = @transform_3, window_bounds = array<i64: 384, 128>}, {pipeline_mode = #tpu.pipeline_mode<synchronous>, transform_indices = @transform_4, window_bounds = array<i64: 1, 128>}, {transform_indices = @transform_5, window_bounds = array<i64: 16, 128>}]} {
    %c0 = arith.constant 0 : index
    %c0_0 = arith.constant 0 : index
    %0 = vector.load %arg1[%c0, %c0_0] : memref<16x128xf32, #tpu.memory_space<vmem>>, vector<16x128xf32>
    %cst = arith.constant 0.000000e+00 : f32
    %1 = vector.broadcast %cst : f32 to vector<1x128xf32>
    %2 = vector.extract_strided_slice %0 {offsets = [0, 0], sizes = [15, 128], strides = [1, 1]} : vector<16x128xf32> to vector<15x128xf32>
    %3 = tpu.concatenate %1, %2 in 0 : vector<1x128xf32>, vector<15x128xf32> -> vector<16x128xf32>
    %4 = vector.extract_strided_slice %0 {offsets = [1, 0], sizes = [15, 128], strides = [1, 1]} : vector<16x128xf32> to vector<15x128xf32>
    %5 = tpu.concatenate %4, %1 in 0 : vector<15x128xf32>, vector<1x128xf32> -> vector<16x128xf32>
    %c0_1 = arith.constant 0 : index
    %c0_2 = arith.constant 0 : index
    %6 = vector.load %arg2[%c0_1, %c0_2] : memref<384x128xf32, #tpu.memory_space<vmem>>, vector<128x128xf32>
    %cst_3 = arith.constant dense<0.000000e+00> : vector<16x128xf32>
    %7 = tpu.matmul %3, %6, %cst_3 {dimension_numbers = #tpu.dot_dimension_numbers<[1], [0], [0], [1], [0, 0, 1, 1], [], []>} : vector<16x128xf32>, vector<128x128xf32>, vector<16x128xf32> -> vector<16x128xf32>
    %c128 = arith.constant 128 : index
    %c0_4 = arith.constant 0 : index
    %8 = vector.load %arg2[%c128, %c0_4] : memref<384x128xf32, #tpu.memory_space<vmem>>, vector<128x128xf32>
    %cst_5 = arith.constant dense<0.000000e+00> : vector<16x128xf32>
    %9 = tpu.matmul %0, %8, %cst_5 {dimension_numbers = #tpu.dot_dimension_numbers<[1], [0], [0], [1], [0, 0, 1, 1], [], []>} : vector<16x128xf32>, vector<128x128xf32>, vector<16x128xf32> -> vector<16x128xf32>
    %10 = arith.addf %7, %9 : vector<16x128xf32>
    %c256 = arith.constant 256 : index
    %c0_6 = arith.constant 0 : index
    %11 = vector.load %arg2[%c256, %c0_6] : memref<384x128xf32, #tpu.memory_space<vmem>>, vector<128x128xf32>
    %cst_7 = arith.constant dense<0.000000e+00> : vector<16x128xf32>
    %12 = tpu.matmul %5, %11, %cst_7 {dimension_numbers = #tpu.dot_dimension_numbers<[1], [0], [0], [1], [0, 0, 1, 1], [], []>} : vector<16x128xf32>, vector<128x128xf32>, vector<16x128xf32> -> vector<16x128xf32>
    %13 = arith.addf %10, %12 : vector<16x128xf32>
    %c0_8 = arith.constant 0 : index
    %c0_9 = arith.constant 0 : index
    %14 = vector.load %arg3[%c0_8, %c0_9] : memref<1x128xf32, #tpu.memory_space<vmem>>, vector<1x128xf32>
    %15 = vector.broadcast %14 : vector<1x128xf32> to vector<16x128xf32>
    %16 = arith.addf %13, %15 : vector<16x128xf32>
    %cst_10 = arith.constant 0.000000e+00 : f32
    %17 = vector.broadcast %cst_10 : f32 to vector<16x128xf32>
    %18 = arith.maximumf %16, %17 : vector<16x128xf32>
    %19 = vector.extract_strided_slice %18 {offsets = [0, 0], sizes = [15, 128], strides = [1, 1]} : vector<16x128xf32> to vector<15x128xf32>
    %20 = tpu.concatenate %1, %19 in 0 : vector<1x128xf32>, vector<15x128xf32> -> vector<16x128xf32>
    %21 = vector.extract_strided_slice %18 {offsets = [1, 0], sizes = [15, 128], strides = [1, 1]} : vector<16x128xf32> to vector<15x128xf32>
    %22 = tpu.concatenate %21, %1 in 0 : vector<15x128xf32>, vector<1x128xf32> -> vector<16x128xf32>
    %c0_11 = arith.constant 0 : index
    %c0_12 = arith.constant 0 : index
    %23 = vector.load %arg4[%c0_11, %c0_12] : memref<384x128xf32, #tpu.memory_space<vmem>>, vector<128x128xf32>
    %cst_13 = arith.constant dense<0.000000e+00> : vector<16x128xf32>
    %24 = tpu.matmul %20, %23, %cst_13 {dimension_numbers = #tpu.dot_dimension_numbers<[1], [0], [0], [1], [0, 0, 1, 1], [], []>} : vector<16x128xf32>, vector<128x128xf32>, vector<16x128xf32> -> vector<16x128xf32>
    %c128_14 = arith.constant 128 : index
    %c0_15 = arith.constant 0 : index
    %25 = vector.load %arg4[%c128_14, %c0_15] : memref<384x128xf32, #tpu.memory_space<vmem>>, vector<128x128xf32>
    %cst_16 = arith.constant dense<0.000000e+00> : vector<16x128xf32>
    %26 = tpu.matmul %18, %25, %cst_16 {dimension_numbers = #tpu.dot_dimension_numbers<[1], [0], [0], [1], [0, 0, 1, 1], [], []>} : vector<16x128xf32>, vector<128x128xf32>, vector<16x128xf32> -> vector<16x128xf32>
    %27 = arith.addf %24, %26 : vector<16x128xf32>
    %c256_17 = arith.constant 256 : index
    %c0_18 = arith.constant 0 : index
    %28 = vector.load %arg4[%c256_17, %c0_18] : memref<384x128xf32, #tpu.memory_space<vmem>>, vector<128x128xf32>
    %cst_19 = arith.constant dense<0.000000e+00> : vector<16x128xf32>
    %29 = tpu.matmul %22, %28, %cst_19 {dimension_numbers = #tpu.dot_dimension_numbers<[1], [0], [0], [1], [0, 0, 1, 1], [], []>} : vector<16x128xf32>, vector<128x128xf32>, vector<16x128xf32> -> vector<16x128xf32>
    %30 = arith.addf %27, %29 : vector<16x128xf32>
    %c0_20 = arith.constant 0 : index
    %c0_21 = arith.constant 0 : index
    %31 = vector.load %arg5[%c0_20, %c0_21] : memref<1x128xf32, #tpu.memory_space<vmem>>, vector<1x128xf32>
    %32 = vector.broadcast %31 : vector<1x128xf32> to vector<16x128xf32>
    %33 = arith.addf %30, %32 : vector<16x128xf32>
    %34 = arith.addf %0, %33 : vector<16x128xf32>
    %c0_22 = arith.constant 0 : index
    %c0_23 = arith.constant 0 : index
    %35 = vector.load %arg6[%c0_22, %c0_23] : memref<16x128xf32, #tpu.memory_space<vmem>>, vector<16x128xf32>
    tpu.vector_store %arg6[%c0_22, %c0_23], %34 {strides = array<i32>} : memref<16x128xf32, #tpu.memory_space<vmem>>, vector<16x128xf32>,
    return
  }
  func.func @transform_0(%arg0: i32) -> (i32, i32) {
    %c0_i32 = arith.constant 0 : i32
    %c0_i32_0 = arith.constant 0 : i32
    return %arg0, %c0_i32 : i32, i32
  }
  func.func @transform_1(%arg0: i32) -> (i32, i32) {
    %c0_i32 = arith.constant 0 : i32
    %c0_i32_0 = arith.constant 0 : i32
    %c0_i32_1 = arith.constant 0 : i32
    return %c0_i32, %c0_i32_0 : i32, i32
  }
  func.func @transform_2(%arg0: i32) -> (i32, i32) {
    %c0_i32 = arith.constant 0 : i32
    %c0_i32_0 = arith.constant 0 : i32
    %c0_i32_1 = arith.constant 0 : i32
    return %c0_i32, %c0_i32_0 : i32, i32
  }
  func.func @transform_3(%arg0: i32) -> (i32, i32) {
    %c0_i32 = arith.constant 0 : i32
    %c0_i32_0 = arith.constant 0 : i32
    %c0_i32_1 = arith.constant 0 : i32
    return %c0_i32, %c0_i32_0 : i32, i32
  }
  func.func @transform_4(%arg0: i32) -> (i32, i32) {
    %c0_i32 = arith.constant 0 : i32
    %c0_i32_0 = arith.constant 0 : i32
    %c0_i32_1 = arith.constant 0 : i32
    return %c0_i32, %c0_i32_0 : i32, i32
  }
  func.func @transform_5(%arg0: i32) -> (i32, i32) {
    %c0_i32 = arith.constant 0 : i32
    %c0_i32_0 = arith.constant 0 : i32
    return %arg0, %c0_i32 : i32, i32
  }
}

</mosaic_0001>

<llo_original>
// kernel: tpu_custom_call.1
$region0: #{tpu_custom_call.1}
  #allocation0 [shape = 'u32[]', space=smem, size = 0x4, offset = 0x4, fixed_abs, tag = 'smem constant byte address 0x4 - core index']
  #allocation1 [shape = 'u32[144,128]{1,0:T(1,128)}', space=vmem, size = 0x12000, scoped, tag = 'internal scratch']
  %s0 = inlined_call_operand.hbm [shape: f32[16,128], index: 0, kind: input, shape index: {}]
  %s1 = inlined_call_operand.hbm [shape: f32[384,128], index: 1, kind: input, shape index: {}]
  %s2 = inlined_call_operand.vmem [shape: f32[1,128], index: 2, kind: input, shape index: {}]
  %s3 = inlined_call_operand.hbm [shape: f32[384,128], index: 3, kind: input, shape index: {}]
  %s4 = inlined_call_operand.vmem [shape: f32[1,128], index: 4, kind: input, shape index: {}]
  %s5 = inlined_call_operand.hbm [shape: f32[16,128], index: 5, kind: output, shape index: {}]
  %s6 = sld [smem:[#allocation0]]
  $region42: #{tpu_custom_call.1} parent=0
    _
  %s8 = ssub.s32 1, %s6
  %s9 = scalar_select 0, %s8, %s6
  $region1: #{tpu_custom_call.1} parent=0
    #allocation2 [shape = 'u8[8192]{0}', space=vmem, size = 0x2000, scoped, tag = 'input window, operand 0, single buffered']
    #allocation3 [shape = 's32[1]{0}', space=sflag, size = 0x4, scoped, tag = 'scoped memory for tpu_custom_call.1']
    #allocation4 [shape = 's32[1]{0}', space=sflag, size = 0x4, scoped, tag = 'scoped memory for tpu_custom_call.1']
    #allocation5 [shape = 'u8[196608]{0}', space=vmem, size = 0x30000, scoped, tag = 'input window, operand 1, single buffered']
    #allocation6 [shape = 's32[1]{0}', space=sflag, size = 0x4, scoped, tag = 'scoped memory for tpu_custom_call.1']
    #allocation7 [shape = 'u8[196608]{0}', space=vmem, size = 0x30000, scoped, tag = 'input window, operand 3, single buffered']
    #allocation8 [shape = 'u8[8192]{0}', space=vmem, size = 0x2000, scoped, tag = 'output window, operand 0, single buffered']
    %10 = vsyncpa [#allocation3], 0
    %11 = vsyncpa [#allocation6], 0
    %12 = vsyncpa [#allocation4], 0
    // Predicated region
    $region2: #{tpu_custom_call.1} parent=1 // pred_check
      _
    $region3: #{tpu_custom_call.1} parent=1 // pred_check_branch
      %14 = sbr.rel (0) target = $region5
    $region4: #{tpu_custom_call.1} parent=1 // pred_region
      %s16 = ssub.s32 256, 256
      %17 = vsyncadd [#allocation3], %s16
      %s18 = sshll.u32 [#allocation2], 4
      %s19 = int_to_ptr.vmem [resolvable:$true] %s18
      %24 = dma.hbm_to_vmem [thread:$0]  %s0, 256, %s19, [#allocation3], 128, 128, 8
    $region5: #{tpu_custom_call.1} parent=1 // pred_fallthru
      _
    // Predicated region
    $region6: #{tpu_custom_call.1} parent=1 // pred_check
      _
    $region7: #{tpu_custom_call.1} parent=1 // pred_check_branch
      %26 = sbr.rel (0) target = $region9
    $region8: #{tpu_custom_call.1} parent=1 // pred_region
      %s28 = ssub.s32 6144, 6144
      %29 = vsyncadd [#allocation6], %s28
      %s30 = sshll.u32 [#allocation5], 4
      %s31 = int_to_ptr.vmem [resolvable:$true] %s30
      %36 = dma.hbm_to_vmem [thread:$0]  %s1, 6144, %s31, [#allocation6], 128, 128, 8
    $region9: #{tpu_custom_call.1} parent=1 // pred_fallthru
      _
    // Predicated region
    $region10: #{tpu_custom_call.1} parent=1 // pred_check
      _
    $region11: #{tpu_custom_call.1} parent=1 // pred_check_branch
      %38 = sbr.rel (0) target = $region13
    $region12: #{tpu_custom_call.1} parent=1 // pred_region
      _
    $region13: #{tpu_custom_call.1} parent=1 // pred_fallthru
      _
    // Predicated region
    $region14: #{tpu_custom_call.1} parent=1 // pred_check
      _
    $region15: #{tpu_custom_call.1} parent=1 // pred_check_branch
      %40 = sbr.rel (0) target = $region17
    $region16: #{tpu_custom_call.1} parent=1 // pred_region
      %s42 = ssub.s32 6144, 6144
      %43 = vsyncadd [#allocation6], %s42
      %s44 = sshll.u32 [#allocation7], 4
      %s45 = int_to_ptr.vmem [resolvable:$true] %s44
      %50 = dma.hbm_to_vmem [thread:$0]  %s3, 6144, %s45, [#allocation6], 128, 128, 8
    $region17: #{tpu_custom_call.1} parent=1 // pred_fallthru
      _
    // Predicated region
    $region18: #{tpu_custom_call.1} parent=1 // pred_check
      _
    $region19: #{tpu_custom_call.1} parent=1 // pred_check_branch
      %52 = sbr.rel (0) target = $region21
    $region20: #{tpu_custom_call.1} parent=1 // pred_region
      _
    $region21: #{tpu_custom_call.1} parent=1 // pred_fallthru
      _
    // Predicated region
    $region22: #{tpu_custom_call.1} parent=1 // pred_check
      _
    $region23: #{tpu_custom_call.1} parent=1 // pred_check_branch
      %54 = sbr.rel (0) target = $region25
    $region24: #{tpu_custom_call.1} parent=1 // pred_region
      %55 = dma.done [#allocation3], 256
    $region25: #{tpu_custom_call.1} parent=1 // pred_fallthru
      _
    // Predicated region
    $region26: #{tpu_custom_call.1} parent=1 // pred_check
      _
    $region27: #{tpu_custom_call.1} parent=1 // pred_check_branch
      %57 = sbr.rel (0) target = $region29
    $region28: #{tpu_custom_call.1} parent=1 // pred_region
      %58 = dma.done [#allocation6], 6144
    $region29: #{tpu_custom_call.1} parent=1 // pred_fallthru
      _
    // Predicated region
    $region30: #{tpu_custom_call.1} parent=1 // pred_check
      _
    $region31: #{tpu_custom_call.1} parent=1 // pred_check_branch
      %60 = sbr.rel (0) target = $region33
    $region32: #{tpu_custom_call.1} parent=1 // pred_region
      %61 = dma.done [#allocation6], 6144
    $region33: #{tpu_custom_call.1} parent=1 // pred_fallthru
      _
    %v62 = vld [vmem:[#allocation2] sm:$0xff]
    %v63 = vld [vmem:[#allocation2 + $0x8] sm:$0xff]
    %vm66 = vcmask 1040384
    %v67 = vrot.slane %v62, 7
    %v68 = vrot.slane %v63, 7
    %v69 = vsel %vm66, %v67, %v68
    %v72 = vsel %vm66, 0.0, %v67
    %vm73 = vcmask 1046528
    %v74 = vrot.slane %v62, 1
    %v75 = vrot.slane %v63, 1
    %v76 = vsel %vm73, %v74, %v75
    %v79 = vsel %vm73, %v75, 0.0
    %v80 = vld [vmem:[#allocation5] sm:$0xff]
    %v81 = vld [vmem:[#allocation5 + $0x8] sm:$0xff]
    %v82 = vld [vmem:[#allocation5 + $0x10] sm:$0xff]
    %v83 = vld [vmem:[#allocation5 + $0x18] sm:$0xff]
    %v84 = vld [vmem:[#allocation5 + $0x20] sm:$0xff]
    %v85 = vld [vmem:[#allocation5 + $0x28] sm:$0xff]
    %v86 = vld [vmem:[#allocation5 + $0x30] sm:$0xff]
    %v87 = vld [vmem:[#allocation5 + $0x38] sm:$0xff]
    %v88 = vld [vmem:[#allocation5 + $0x40] sm:$0xff]
    %v89 = vld [vmem:[#allocation5 + $0x48] sm:$0xff]
    %v90 = vld [vmem:[#allocation5 + $0x50] sm:$0xff]
    %v91 = vld [vmem:[#allocation5 + $0x58] sm:$0xff]
    %v92 = vld [vmem:[#allocation5 + $0x60] sm:$0xff]
    %v93 = vld [vmem:[#allocation5 + $0x68] sm:$0xff]
    %v94 = vld [vmem:[#allocation5 + $0x70] sm:$0xff]
    %v95 = vld [vmem:[#allocation5 + $0x78] sm:$0xff]
    %v96 = vld [vmem:[#allocation5 + $0x80] sm:$0xff]
    %v97 = vld [vmem:[#allocation5 + $0x88] sm:$0xff]
    %v98 = vld [vmem:[#allocation5 + $0x90] sm:$0xff]
    %v99 = vld [vmem:[#allocation5 + $0x98] sm:$0xff]
    %v100 = vld [vmem:[#allocation5 + $0xa0] sm:$0xff]
    %v101 = vld [vmem:[#allocation5 + $0xa8] sm:$0xff]
    %v102 = vld [vmem:[#allocation5 + $0xb0] sm:$0xff]
    %v103 = vld [vmem:[#allocation5 + $0xb8] sm:$0xff]
    %v104 = vld [vmem:[#allocation5 + $0xc0] sm:$0xff]
    %v105 = vld [vmem:[#allocation5 + $0xc8] sm:$0xff]
    %v106 = vld [vmem:[#allocation5 + $0xd0] sm:$0xff]
    %v107 = vld [vmem:[#allocation5 + $0xd8] sm:$0xff]
    %v108 = vld [vmem:[#allocation5 + $0xe0] sm:$0xff]
    %v109 = vld [vmem:[#allocation5 + $0xe8] sm:$0xff]
    %v110 = vld [vmem:[#allocation5 + $0xf0] sm:$0xff]
    %v111 = vld [vmem:[#allocation5 + $0xf8] sm:$0xff]
    %112 = vmatprep.subr.mxu0 0.0
    %113 = vmatpush1.msra.mxu0 %v96
    %114 = vmatprep.subr.mxu0 0.0
    %115 = vmatpush1.msra.mxu0 %v97
    %116 = vmatprep.subr.mxu0 0.0
    %117 = vmatpush1.msra.mxu0 %v98
    %118 = vmatprep.subr.mxu0 0.0
    %119 = vmatpush1.msra.mxu0 %v99
    %120 = vmatprep.subr.mxu0 0.0
    %121 = vmatpush1.msra.mxu0 %v100
    %122 = vmatprep.subr.mxu0 0.0
    %123 = vmatpush1.msra.mxu0 %v101
    %124 = vmatprep.subr.mxu0 0.0
    %125 = vmatpush1.msra.mxu0 %v102
    %126 = vmatprep.subr.mxu0 0.0
    %127 = vmatpush1.msra.mxu0 %v103
    %128 = vmatprep.subr.mxu0 0.0
    %129 = vmatpush1.msra.mxu0 %v104
    %130 = vmatprep.subr.mxu0 0.0
    %131 = vmatpush1.msra.mxu0 %v105
    %132 = vmatprep.subr.mxu0 0.0
    %133 = vmatpush1.msra.mxu0 %v106
    %134 = vmatprep.subr.mxu0 0.0
    %135 = vmatpush1.msra.mxu0 %v107
    %136 = vmatprep.subr.mxu0 0.0
    %137 = vmatpush1.msra.mxu0 %v108
    %138 = vmatprep.subr.mxu0 0.0
    %139 = vmatpush1.msra.mxu0 %v109
    %140 = vmatprep.subr.mxu0 0.0
    %141 = vmatpush1.msra.mxu0 %v110
    %142 = vmatprep.subr.mxu0 0.0
    %143 = vmatpush1.msra.mxu0 %v111
    %144 = vmatprep.subr.mxu0 0.0
    %145 = vmatpush1.msra.mxu0 0.0
    %146 = vmatprep.subr.mxu0 0.0
    %147 = vmatpush1.msra.mxu0 0.0
    %148 = vmatprep.subr.mxu0 0.0
    %149 = vmatpush1.msra.mxu0 0.0
    %150 = vmatprep.subr.mxu0 0.0
    %151 = vmatpush1.msra.mxu0 0.0
    %152 = vmatprep.subr.mxu0 0.0
    %153 = vmatpush1.msra.mxu0 0.0
    %154 = vmatprep.subr.mxu0 0.0
    %155 = vmatpush1.msra.mxu0 0.0
    %156 = vmatprep.subr.mxu0 0.0
    %157 = vmatpush1.msra.mxu0 0.0
    %158 = vmatprep.subr.mxu0 0.0
    %159 = vmatpush1.msra.mxu0 0.0
    %160 = vmatprep.subr.mxu0 0.0
    %161 = vmatpush1.msra.mxu0 0.0
    %162 = vmatprep.subr.mxu0 0.0
    %163 = vmatpush1.msra.mxu0 0.0
    %164 = vmatprep.subr.mxu0 0.0
    %165 = vmatpush1.msra.mxu0 0.0
    %166 = vmatprep.subr.mxu0 0.0
    %167 = vmatpush1.msra.mxu0 0.0
    %168 = vmatprep.subr.mxu0 0.0
    %169 = vmatpush1.msra.mxu0 0.0
    %170 = vmatprep.subr.mxu0 0.0
    %171 = vmatpush1.msra.mxu0 0.0
    %172 = vmatprep.subr.mxu0 0.0
    %173 = vmatpush1.msra.mxu0 0.0
    %174 = vmatprep.subr.mxu0 0.0
    %175 = vmatpush1.msra.mxu0 0.0
    %176 = vmatprep.mubr.f32.mxu0 0.0
    %177 = vmatmul.mubr.f32.gmra.mrb[0].mxu0 %v62
    %v178 = vpop.f32.mrb[0].mxu0
    %v179 = vadd.f32 0.0, %v178
    %v180 = vpop.f32.mrb[0].mxu0
    %181 = vmatprep.mubr.f32.mxu0 0.0
    %182 = vmatmul.mubr.f32.gmra.mrb[0].mxu0 %v63
    %v183 = vpop.f32.mrb[0].mxu0
    %v184 = vadd.f32 0.0, %v183
    %v185 = vpop.f32.mrb[0].mxu0
    %186 = vdwg.mxu0
    %187 = vmatprep.subr.mxu0 0.0
    %188 = vmatpush1.msra.mxu0 %v80
    %189 = vmatprep.subr.mxu0 0.0
    %190 = vmatpush1.msra.mxu0 %v81
    %191 = vmatprep.subr.mxu0 0.0
    %192 = vmatpush1.msra.mxu0 %v82
    %193 = vmatprep.subr.mxu0 0.0
    %194 = vmatpush1.msra.mxu0 %v83
    %195 = vmatprep.subr.mxu0 0.0
    %196 = vmatpush1.msra.mxu0 %v84
    %197 = vmatprep.subr.mxu0 0.0
    %198 = vmatpush1.msra.mxu0 %v85
    %199 = vmatprep.subr.mxu0 0.0
    %200 = vmatpush1.msra.mxu0 %v86
    %201 = vmatprep.subr.mxu0 0.0
    %202 = vmatpush1.msra.mxu0 %v87
    %203 = vmatprep.subr.mxu0 0.0
    %204 = vmatpush1.msra.mxu0 %v88
    %205 = vmatprep.subr.mxu0 0.0
    %206 = vmatpush1.msra.mxu0 %v89
    %207 = vmatprep.subr.mxu0 0.0
    %208 = vmatpush1.msra.mxu0 %v90
    %209 = vmatprep.subr.mxu0 0.0
    %210 = vmatpush1.msra.mxu0 %v91
    %211 = vmatprep.subr.mxu0 0.0
    %212 = vmatpush1.msra.mxu0 %v92
    %213 = vmatprep.subr.mxu0 0.0
    %214 = vmatpush1.msra.mxu0 %v93
    %215 = vmatprep.subr.mxu0 0.0
    %216 = vmatpush1.msra.mxu0 %v94
    %217 = vmatprep.subr.mxu0 0.0
    %218 = vmatpush1.msra.mxu0 %v95
    %219 = vmatprep.subr.mxu0 0.0
    %220 = vmatpush1.msra.mxu0 0.0
    %221 = vmatprep.subr.mxu0 0.0
    %222 = vmatpush1.msra.mxu0 0.0
    %223 = vmatprep.subr.mxu0 0.0
    %224 = vmatpush1.msra.mxu0 0.0
    %225 = vmatprep.subr.mxu0 0.0
    %226 = vmatpush1.msra.mxu0 0.0
    %227 = vmatprep.subr.mxu0 0.0
    %228 = vmatpush1.msra.mxu0 0.0
    %229 = vmatprep.subr.mxu0 0.0
    %230 = vmatpush1.msra.mxu0 0.0
    %231 = vmatprep.subr.mxu0 0.0
    %232 = vmatpush1.msra.mxu0 0.0
    %233 = vmatprep.subr.mxu0 0.0
    %234 = vmatpush1.msra.mxu0 0.0
    %235 = vmatprep.subr.mxu0 0.0
    %236 = vmatpush1.msra.mxu0 0.0
    %237 = vmatprep.subr.mxu0 0.0
    %238 = vmatpush1.msra.mxu0 0.0
    %239 = vmatprep.subr.mxu0 0.0
    %240 = vmatpush1.msra.mxu0 0.0
    %241 = vmatprep.subr.mxu0 0.0
    %242 = vmatpush1.msra.mxu0 0.0
    %243 = vmatprep.subr.mxu0 0.0
    %244 = vmatpush1.msra.mxu0 0.0
    %245 = vmatprep.subr.mxu0 0.0
    %246 = vmatpush1.msra.mxu0 0.0
    %247 = vmatprep.subr.mxu0 0.0
    %248 = vmatpush1.msra.mxu0 0.0
    %249 = vmatprep.subr.mxu0 0.0
    %250 = vmatpush1.msra.mxu0 0.0
    %251 = vmatprep.mubr.f32.mxu0 0.0
    %252 = vmatmul.mubr.f32.gmra.mrb[0].mxu0 %v72
    %v253 = vpop.f32.mrb[0].mxu0
    %v254 = vadd.f32 %v179, %v253
    %v255 = vpop.f32.mrb[0].mxu0
    %256 = vmatprep.mubr.f32.mxu0 0.0
    %257 = vmatmul.mubr.f32.gmra.mrb[0].mxu0 %v69
    %v258 = vpop.f32.mrb[0].mxu0
    %v259 = vadd.f32 %v184, %v258
    %v260 = vpop.f32.mrb[0].mxu0
    %261 = vdwg.mxu0
    %v262 = vld [vmem:[#allocation5 + $0x100] sm:$0xff]
    %v263 = vld [vmem:[#allocation5 + $0x108] sm:$0xff]
    %v264 = vld [vmem:[#allocation5 + $0x110] sm:$0xff]
    %v265 = vld [vmem:[#allocation5 + $0x118] sm:$0xff]
    %v266 = vld [vmem:[#allocation5 + $0x120] sm:$0xff]
    %v267 = vld [vmem:[#allocation5 + $0x128] sm:$0xff]
    %v268 = vld [vmem:[#allocation5 + $0x130] sm:$0xff]
    %v269 = vld [vmem:[#allocation5 + $0x138] sm:$0xff]
    %v270 = vld [vmem:[#allocation5 + $0x140] sm:$0xff]
    %v271 = vld [vmem:[#allocation5 + $0x148] sm:$0xff]
    %v272 = vld [vmem:[#allocation5 + $0x150] sm:$0xff]
    %v273 = vld [vmem:[#allocation5 + $0x158] sm:$0xff]
    %v274 = vld [vmem:[#allocation5 + $0x160] sm:$0xff]
    %v275 = vld [vmem:[#allocation5 + $0x168] sm:$0xff]
    %v276 = vld [vmem:[#allocation5 + $0x170] sm:$0xff]
    %v277 = vld [vmem:[#allocation5 + $0x178] sm:$0xff]
    %278 = vmatprep.subr.mxu0 0.0
    %279 = vmatpush1.msra.mxu0 %v262
    %280 = vmatprep.subr.mxu0 0.0
    %281 = vmatpush1.msra.mxu0 %v263
    %282 = vmatprep.subr.mxu0 0.0
    %283 = vmatpush1.msra.mxu0 %v264
    %284 = vmatprep.subr.mxu0 0.0
    %285 = vmatpush1.msra.mxu0 %v265
    %286 = vmatprep.subr.mxu0 0.0
    %287 = vmatpush1.msra.mxu0 %v266
    %288 = vmatprep.subr.mxu0 0.0
    %289 = vmatpush1.msra.mxu0 %v267
    %290 = vmatprep.subr.mxu0 0.0
    %291 = vmatpush1.msra.mxu0 %v268
    %292 = vmatprep.subr.mxu0 0.0
    %293 = vmatpush1.msra.mxu0 %v269
    %294 = vmatprep.subr.mxu0 0.0
    %295 = vmatpush1.msra.mxu0 %v270
    %296 = vmatprep.subr.mxu0 0.0
    %297 = vmatpush1.msra.mxu0 %v271
    %298 = vmatprep.subr.mxu0 0.0
    %299 = vmatpush1.msra.mxu0 %v272
    %300 = vmatprep.subr.mxu0 0.0
    %301 = vmatpush1.msra.mxu0 %v273
    %302 = vmatprep.subr.mxu0 0.0
    %303 = vmatpush1.msra.mxu0 %v274
    %304 = vmatprep.subr.mxu0 0.0
    %305 = vmatpush1.msra.mxu0 %v275
    %306 = vmatprep.subr.mxu0 0.0
    %307 = vmatpush1.msra.mxu0 %v276
    %308 = vmatprep.subr.mxu0 0.0
    %309 = vmatpush1.msra.mxu0 %v277
    %310 = vmatprep.subr.mxu0 0.0
    %311 = vmatpush1.msra.mxu0 0.0
    %312 = vmatprep.subr.mxu0 0.0
    %313 = vmatpush1.msra.mxu0 0.0
    %314 = vmatprep.subr.mxu0 0.0
    %315 = vmatpush1.msra.mxu0 0.0
    %316 = vmatprep.subr.mxu0 0.0
    %317 = vmatpush1.msra.mxu0 0.0
    %318 = vmatprep.subr.mxu0 0.0
    %319 = vmatpush1.msra.mxu0 0.0
    %320 = vmatprep.subr.mxu0 0.0
    %321 = vmatpush1.msra.mxu0 0.0
    %322 = vmatprep.subr.mxu0 0.0
    %323 = vmatpush1.msra.mxu0 0.0
    %324 = vmatprep.subr.mxu0 0.0
    %325 = vmatpush1.msra.mxu0 0.0
    %326 = vmatprep.subr.mxu0 0.0
    %327 = vmatpush1.msra.mxu0 0.0
    %328 = vmatprep.subr.mxu0 0.0
    %329 = vmatpush1.msra.mxu0 0.0
    %330 = vmatprep.subr.mxu0 0.0
    %331 = vmatpush1.msra.mxu0 0.0
    %332 = vmatprep.subr.mxu0 0.0
    %333 = vmatpush1.msra.mxu0 0.0
    %334 = vmatprep.subr.mxu0 0.0
    %335 = vmatpush1.msra.mxu0 0.0
    %336 = vmatprep.subr.mxu0 0.0
    %337 = vmatpush1.msra.mxu0 0.0
    %338 = vmatprep.subr.mxu0 0.0
    %339 = vmatpush1.msra.mxu0 0.0
    %340 = vmatprep.subr.mxu0 0.0
    %341 = vmatpush1.msra.mxu0 0.0
    %342 = vmatprep.mubr.f32.mxu0 0.0
    %343 = vmatmul.mubr.f32.gmra.mrb[0].mxu0 %v76
    %v344 = vpop.f32.mrb[0].mxu0
    %v345 = vadd.f32 0.0, %v344
    %v346 = vpop.f32.mrb[0].mxu0
    %347 = vmatprep.mubr.f32.mxu0 0.0
    %348 = vmatmul.mubr.f32.gmra.mrb[0].mxu0 %v79
    %v349 = vpop.f32.mrb[0].mxu0
    %v350 = vadd.f32 0.0, %v349
    %v351 = vpop.f32.mrb[0].mxu0
    %352 = vdwg.mxu0
    %v353 = vadd.f32 %v254, %v345
    %v354 = vadd.f32 %v259, %v350
    %v355 = vld [vmem:[%s2] sm:$0x1]
    %v357 = vlaneseq
    %v358 = vshrl.u32 %v357, 7
    %v359 = vsub.s32 0, %v358
    %v360 = vrot.slane %v355, %v359
    %v362 = vadd.f32 %v353, %v360
    %v363 = vadd.f32 %v354, %v360
    %v364 = vmax.f32 %v362, 0.0
    %v365 = vmax.f32 %v363, 0.0
    %v368 = vrot.slane %v364, 7
    %v369 = vrot.slane %v365, 7
    %v370 = vsel %vm66, %v368, %v369
    %v373 = vsel %vm66, 0.0, %v368
    %v374 = vrot.slane %v364, 1
    %v375 = vrot.slane %v365, 1
    %v376 = vsel %vm73, %v374, %v375
    %v379 = vsel %vm73, %v375, 0.0
    %v380 = vld [vmem:[#allocation7] sm:$0xff]
    %v381 = vld [vmem:[#allocation7 + $0x8] sm:$0xff]
    %v382 = vld [vmem:[#allocation7 + $0x10] sm:$0xff]
    %v383 = vld [vmem:[#allocation7 + $0x18] sm:$0xff]
    %v384 = vld [vmem:[#allocation7 + $0x20] sm:$0xff]
    %v385 = vld [vmem:[#allocation7 + $0x28] sm:$0xff]
    %v386 = vld [vmem:[#allocation7 + $0x30] sm:$0xff]
    %v387 = vld [vmem:[#allocation7 + $0x38] sm:$0xff]
    %v388 = vld [vmem:[#allocation7 + $0x40] sm:$0xff]
    %v389 = vld [vmem:[#allocation7 + $0x48] sm:$0xff]
    %v390 = vld [vmem:[#allocation7 + $0x50] sm:$0xff]
    %v391 = vld [vmem:[#allocation7 + $0x58] sm:$0xff]
    %v392 = vld [vmem:[#allocation7 + $0x60] sm:$0xff]
    %v393 = vld [vmem:[#allocation7 + $0x68] sm:$0xff]
    %v394 = vld [vmem:[#allocation7 + $0x70] sm:$0xff]
    %v395 = vld [vmem:[#allocation7 + $0x78] sm:$0xff]
    %v396 = vld [vmem:[#allocation7 + $0x80] sm:$0xff]
    %v397 = vld [vmem:[#allocation7 + $0x88] sm:$0xff]
    %v398 = vld [vmem:[#allocation7 + $0x90] sm:$0xff]
    %v399 = vld [vmem:[#allocation7 + $0x98] sm:$0xff]
    %v400 = vld [vmem:[#allocation7 + $0xa0] sm:$0xff]
    %v401 = vld [vmem:[#allocation7 + $0xa8] sm:$0xff]
    %v402 = vld [vmem:[#allocation7 + $0xb0] sm:$0xff]
    %v403 = vld [vmem:[#allocation7 + $0xb8] sm:$0xff]
    %v404 = vld [vmem:[#allocation7 + $0xc0] sm:$0xff]
    %v405 = vld [vmem:[#allocation7 + $0xc8] sm:$0xff]
    %v406 = vld [vmem:[#allocation7 + $0xd0] sm:$0xff]
    %v407 = vld [vmem:[#allocation7 + $0xd8] sm:$0xff]
    %v408 = vld [vmem:[#allocation7 + $0xe0] sm:$0xff]
    %v409 = vld [vmem:[#allocation7 + $0xe8] sm:$0xff]
    %v410 = vld [vmem:[#allocation7 + $0xf0] sm:$0xff]
    %v411 = vld [vmem:[#allocation7 + $0xf8] sm:$0xff]
    %412 = vmatprep.subr.mxu0 0.0
    %413 = vmatpush1.msra.mxu0 %v396
    %414 = vmatprep.subr.mxu0 0.0
    %415 = vmatpush1.msra.mxu0 %v397
    %416 = vmatprep.subr.mxu0 0.0
    %417 = vmatpush1.msra.mxu0 %v398
    %418 = vmatprep.subr.mxu0 0.0
    %419 = vmatpush1.msra.mxu0 %v399
    %420 = vmatprep.subr.mxu0 0.0
    %421 = vmatpush1.msra.mxu0 %v400
    %422 = vmatprep.subr.mxu0 0.0
    %423 = vmatpush1.msra.mxu0 %v401
    %424 = vmatprep.subr.mxu0 0.0
    %425 = vmatpush1.msra.mxu0 %v402
    %426 = vmatprep.subr.mxu0 0.0
    %427 = vmatpush1.msra.mxu0 %v403
    %428 = vmatprep.subr.mxu0 0.0
    %429 = vmatpush1.msra.mxu0 %v404
    %430 = vmatprep.subr.mxu0 0.0
    %431 = vmatpush1.msra.mxu0 %v405
    %432 = vmatprep.subr.mxu0 0.0
    %433 = vmatpush1.msra.mxu0 %v406
    %434 = vmatprep.subr.mxu0 0.0
    %435 = vmatpush1.msra.mxu0 %v407
    %436 = vmatprep.subr.mxu0 0.0
    %437 = vmatpush1.msra.mxu0 %v408
    %438 = vmatprep.subr.mxu0 0.0
    %439 = vmatpush1.msra.mxu0 %v409
    %440 = vmatprep.subr.mxu0 0.0
    %441 = vmatpush1.msra.mxu0 %v410
    %442 = vmatprep.subr.mxu0 0.0
    %443 = vmatpush1.msra.mxu0 %v411
    %444 = vmatprep.subr.mxu0 0.0
    %445 = vmatpush1.msra.mxu0 0.0
    %446 = vmatprep.subr.mxu0 0.0
    %447 = vmatpush1.msra.mxu0 0.0
    %448 = vmatprep.subr.mxu0 0.0
    %449 = vmatpush1.msra.mxu0 0.0
    %450 = vmatprep.subr.mxu0 0.0
    %451 = vmatpush1.msra.mxu0 0.0
    %452 = vmatprep.subr.mxu0 0.0
    %453 = vmatpush1.msra.mxu0 0.0
    %454 = vmatprep.subr.mxu0 0.0
    %455 = vmatpush1.msra.mxu0 0.0
    %456 = vmatprep.subr.mxu0 0.0
    %457 = vmatpush1.msra.mxu0 0.0
    %458 = vmatprep.subr.mxu0 0.0
    %459 = vmatpush1.msra.mxu0 0.0
    %460 = vmatprep.subr.mxu0 0.0
    %461 = vmatpush1.msra.mxu0 0.0
    %462 = vmatprep.subr.mxu0 0.0
    %463 = vmatpush1.msra.mxu0 0.0
    %464 = vmatprep.subr.mxu0 0.0
    %465 = vmatpush1.msra.mxu0 0.0
    %466 = vmatprep.subr.mxu0 0.0
    %467 = vmatpush1.msra.mxu0 0.0
    %468 = vmatprep.subr.mxu0 0.0
    %469 = vmatpush1.msra.mxu0 0.0
    %470 = vmatprep.subr.mxu0 0.0
    %471 = vmatpush1.msra.mxu0 0.0
    %472 = vmatprep.subr.mxu0 0.0
    %473 = vmatpush1.msra.mxu0 0.0
    %474 = vmatprep.subr.mxu0 0.0
    %475 = vmatpush1.msra.mxu0 0.0
    %476 = vmatprep.mubr.f32.mxu0 0.0
    %477 = vmatmul.mubr.f32.gmra.mrb[0].mxu0 %v364
    %v478 = vpop.f32.mrb[0].mxu0
    %v479 = vadd.f32 0.0, %v478
    %v480 = vpop.f32.mrb[0].mxu0
    %481 = vmatprep.mubr.f32.mxu0 0.0
    %482 = vmatmul.mubr.f32.gmra.mrb[0].mxu0 %v365
    %v483 = vpop.f32.mrb[0].mxu0
    %v484 = vadd.f32 0.0, %v483
    %v485 = vpop.f32.mrb[0].mxu0
    %486 = vdwg.mxu0
    %487 = vmatprep.subr.mxu0 0.0
    %488 = vmatpush1.msra.mxu0 %v380
    %489 = vmatprep.subr.mxu0 0.0
    %490 = vmatpush1.msra.mxu0 %v381
    %491 = vmatprep.subr.mxu0 0.0
    %492 = vmatpush1.msra.mxu0 %v382
    %493 = vmatprep.subr.mxu0 0.0
    %494 = vmatpush1.msra.mxu0 %v383
    %495 = vmatprep.subr.mxu0 0.0
    %496 = vmatpush1.msra.mxu0 %v384
    %497 = vmatprep.subr.mxu0 0.0
    %498 = vmatpush1.msra.mxu0 %v385
    %499 = vmatprep.subr.mxu0 0.0
    %500 = vmatpush1.msra.mxu0 %v386
    %501 = vmatprep.subr.mxu0 0.0
    %502 = vmatpush1.msra.mxu0 %v387
    %503 = vmatprep.subr.mxu0 0.0
    %504 = vmatpush1.msra.mxu0 %v388
    %505 = vmatprep.subr.mxu0 0.0
    %506 = vmatpush1.msra.mxu0 %v389
    %507 = vmatprep.subr.mxu0 0.0
    %508 = vmatpush1.msra.mxu0 %v390
    %509 = vmatprep.subr.mxu0 0.0
    %510 = vmatpush1.msra.mxu0 %v391
    %511 = vmatprep.subr.mxu0 0.0
    %512 = vmatpush1.msra.mxu0 %v392
    %513 = vmatprep.subr.mxu0 0.0
    %514 = vmatpush1.msra.mxu0 %v393
    %515 = vmatprep.subr.mxu0 0.0
    %516 = vmatpush1.msra.mxu0 %v394
    %517 = vmatprep.subr.mxu0 0.0
    %518 = vmatpush1.msra.mxu0 %v395
    %519 = vmatprep.subr.mxu0 0.0
    %520 = vmatpush1.msra.mxu0 0.0
    %521 = vmatprep.subr.mxu0 0.0
    %522 = vmatpush1.msra.mxu0 0.0
    %523 = vmatprep.subr.mxu0 0.0
    %524 = vmatpush1.msra.mxu0 0.0
    %525 = vmatprep.subr.mxu0 0.0
    %526 = vmatpush1.msra.mxu0 0.0
    %527 = vmatprep.subr.mxu0 0.0
    %528 = vmatpush1.msra.mxu0 0.0
    %529 = vmatprep.subr.mxu0 0.0
    %530 = vmatpush1.msra.mxu0 0.0
    %531 = vmatprep.subr.mxu0 0.0
    %532 = vmatpush1.msra.mxu0 0.0
    %533 = vmatprep.subr.mxu0 0.0
    %534 = vmatpush1.msra.mxu0 0.0
    %535 = vmatprep.subr.mxu0 0.0
    %536 = vmatpush1.msra.mxu0 0.0
    %537 = vmatprep.subr.mxu0 0.0
    %538 = vmatpush1.msra.mxu0 0.0
    %539 = vmatprep.subr.mxu0 0.0
    %540 = vmatpush1.msra.mxu0 0.0
    %541 = vmatprep.subr.mxu0 0.0
    %542 = vmatpush1.msra.mxu0 0.0
    %543 = vmatprep.subr.mxu0 0.0
    %544 = vmatpush1.msra.mxu0 0.0
    %545 = vmatprep.subr.mxu0 0.0
    %546 = vmatpush1.msra.mxu0 0.0
    %547 = vmatprep.subr.mxu0 0.0
    %548 = vmatpush1.msra.mxu0 0.0
    %549 = vmatprep.subr.mxu0 0.0
    %550 = vmatpush1.msra.mxu0 0.0
    %551 = vmatprep.mubr.f32.mxu0 0.0
    %552 = vmatmul.mubr.f32.gmra.mrb[0].mxu0 %v373
    %v553 = vpop.f32.mrb[0].mxu0
    %v554 = vadd.f32 %v479, %v553
    %v555 = vpop.f32.mrb[0].mxu0
    %556 = vmatprep.mubr.f32.mxu0 0.0
    %557 = vmatmul.mubr.f32.gmra.mrb[0].mxu0 %v370
    %v558 = vpop.f32.mrb[0].mxu0
    %v559 = vadd.f32 %v484, %v558
    %v560 = vpop.f32.mrb[0].mxu0
    %561 = vdwg.mxu0
    %v562 = vld [vmem:[#allocation7 + $0x100] sm:$0xff]
    %v563 = vld [vmem:[#allocation7 + $0x108] sm:$0xff]
    %v564 = vld [vmem:[#allocation7 + $0x110] sm:$0xff]
    %v565 = vld [vmem:[#allocation7 + $0x118] sm:$0xff]
    %v566 = vld [vmem:[#allocation7 + $0x120] sm:$0xff]
    %v567 = vld [vmem:[#allocation7 + $0x128] sm:$0xff]
    %v568 = vld [vmem:[#allocation7 + $0x130] sm:$0xff]
    %v569 = vld [vmem:[#allocation7 + $0x138] sm:$0xff]
    %v570 = vld [vmem:[#allocation7 + $0x140] sm:$0xff]
    %v571 = vld [vmem:[#allocation7 + $0x148] sm:$0xff]
    %v572 = vld [vmem:[#allocation7 + $0x150] sm:$0xff]
    %v573 = vld [vmem:[#allocation7 + $0x158] sm:$0xff]
    %v574 = vld [vmem:[#allocation7 + $0x160] sm:$0xff]
    %v575 = vld [vmem:[#allocation7 + $0x168] sm:$0xff]
    %v576 = vld [vmem:[#allocation7 + $0x170] sm:$0xff]
    %v577 = vld [vmem:[#allocation7 + $0x178] sm:$0xff]
    %578 = vmatprep.subr.mxu0 0.0
    %579 = vmatpush1.msra.mxu0 %v562
    %580 = vmatprep.subr.mxu0 0.0
    %581 = vmatpush1.msra.mxu0 %v563
    %582 = vmatprep.subr.mxu0 0.0
    %583 = vmatpush1.msra.mxu0 %v564
    %584 = vmatprep.subr.mxu0 0.0
    %585 = vmatpush1.msra.mxu0 %v565
    %586 = vmatprep.subr.mxu0 0.0
    %587 = vmatpush1.msra.mxu0 %v566
    %588 = vmatprep.subr.mxu0 0.0
    %589 = vmatpush1.msra.mxu0 %v567
    %590 = vmatprep.subr.mxu0 0.0
    %591 = vmatpush1.msra.mxu0 %v568
    %592 = vmatprep.subr.mxu0 0.0
    %593 = vmatpush1.msra.mxu0 %v569
    %594 = vmatprep.subr.mxu0 0.0
    %595 = vmatpush1.msra.mxu0 %v570
    %596 = vmatprep.subr.mxu0 0.0
    %597 = vmatpush1.msra.mxu0 %v571
    %598 = vmatprep.subr.mxu0 0.0
    %599 = vmatpush1.msra.mxu0 %v572
    %600 = vmatprep.subr.mxu0 0.0
    %601 = vmatpush1.msra.mxu0 %v573
    %602 = vmatprep.subr.mxu0 0.0
    %603 = vmatpush1.msra.mxu0 %v574
    %604 = vmatprep.subr.mxu0 0.0
    %605 = vmatpush1.msra.mxu0 %v575
    %606 = vmatprep.subr.mxu0 0.0
    %607 = vmatpush1.msra.mxu0 %v576
    %608 = vmatprep.subr.mxu0 0.0
    %609 = vmatpush1.msra.mxu0 %v577
    %610 = vmatprep.subr.mxu0 0.0
    %611 = vmatpush1.msra.mxu0 0.0
    %612 = vmatprep.subr.mxu0 0.0
    %613 = vmatpush1.msra.mxu0 0.0
    %614 = vmatprep.subr.mxu0 0.0
    %615 = vmatpush1.msra.mxu0 0.0
    %616 = vmatprep.subr.mxu0 0.0
    %617 = vmatpush1.msra.mxu0 0.0
    %618 = vmatprep.subr.mxu0 0.0
    %619 = vmatpush1.msra.mxu0 0.0
    %620 = vmatprep.subr.mxu0 0.0
    %621 = vmatpush1.msra.mxu0 0.0
    %622 = vmatprep.subr.mxu0 0.0
    %623 = vmatpush1.msra.mxu0 0.0
    %624 = vmatprep.subr.mxu0 0.0
    %625 = vmatpush1.msra.mxu0 0.0
    %626 = vmatprep.subr.mxu0 0.0
    %627 = vmatpush1.msra.mxu0 0.0
    %628 = vmatprep.subr.mxu0 0.0
    %629 = vmatpush1.msra.mxu0 0.0
    %630 = vmatprep.subr.mxu0 0.0
    %631 = vmatpush1.msra.mxu0 0.0
    %632 = vmatprep.subr.mxu0 0.0
    %633 = vmatpush1.msra.mxu0 0.0
    %634 = vmatprep.subr.mxu0 0.0
    %635 = vmatpush1.msra.mxu0 0.0
    %636 = vmatprep.subr.mxu0 0.0
    %637 = vmatpush1.msra.mxu0 0.0
    %638 = vmatprep.subr.mxu0 0.0
    %639 = vmatpush1.msra.mxu0 0.0
    %640 = vmatprep.subr.mxu0 0.0
    %641 = vmatpush1.msra.mxu0 0.0
    %642 = vmatprep.mubr.f32.mxu0 0.0
    %643 = vmatmul.mubr.f32.gmra.mrb[0].mxu0 %v376
    %v644 = vpop.f32.mrb[0].mxu0
    %v645 = vadd.f32 0.0, %v644
    %v646 = vpop.f32.mrb[0].mxu0
    %647 = vmatprep.mubr.f32.mxu0 0.0
    %648 = vmatmul.mubr.f32.gmra.mrb[0].mxu0 %v379
    %v649 = vpop.f32.mrb[0].mxu0
    %v650 = vadd.f32 0.0, %v649
    %v651 = vpop.f32.mrb[0].mxu0
    %652 = vdwg.mxu0
    %v653 = vadd.f32 %v554, %v645
    %v654 = vadd.f32 %v559, %v650
    %v655 = vld [vmem:[%s4] sm:$0x1]
    %v657 = vlaneseq
    %v658 = vshrl.u32 %v657, 7
    %v659 = vsub.s32 0, %v658
    %v660 = vrot.slane %v655, %v659
    %v662 = vadd.f32 %v653, %v660
    %v663 = vadd.f32 %v654, %v660
    %v664 = vadd.f32 %v62, %v662
    %v665 = vadd.f32 %v63, %v663
    %666 = vst [vmem:[#allocation8] sm:$0xff] %v664
    %667 = vst [vmem:[#allocation8 + $0x8] sm:$0xff] %v665
    // Predicated region
    $region34: #{tpu_custom_call.1} parent=1 // pred_check
      _
    $region35: #{tpu_custom_call.1} parent=1 // pred_check_branch
      %669 = sbr.rel (0) target = $region37
    $region36: #{tpu_custom_call.1} parent=1 // pred_region
      %s671 = ssub.s32 256, 256
      %672 = vsyncadd [#allocation4], %s671
      %s673 = sshll.u32 [#allocation8], 4
      %s674 = int_to_ptr.vmem [resolvable:$true] %s673
      %679 = dma.vmem_to_hbm [thread:$0]  %s674, 256, %s5, [#allocation4], 128, 128, 8
    $region37: #{tpu_custom_call.1} parent=1 // pred_fallthru
      _
    // Predicated region
    $region38: #{tpu_custom_call.1} parent=1 // pred_check
      _
    $region39: #{tpu_custom_call.1} parent=1 // pred_check_branch
      %681 = sbr.rel (0) target = $region41
    $region40: #{tpu_custom_call.1} parent=1 // pred_region
      %682 = dma.done [#allocation4], 256
    $region41: #{tpu_custom_call.1} parent=1 // pred_fallthru
      _
    %683 = vsyncpa [#allocation3], 1
    %684 = vsyncpa [#allocation6], 1
    %685 = vsyncpa [#allocation4], 1

</llo_original>
